<compile_context>
chip_gen: v6e
topology: v6e:2x2x1
jax: 0.10.0
libtpu: 0.0.40
codegen_flags: <defaults>
</compile_context>

<pallas_src>
import numpy as np
import jax
import jax.numpy as jnp
from jax.experimental import pallas as pl
from jax.experimental.pallas import tpu as pltpu

# ---- model hyper-parameters (small, consistent with the module) ----
VOCAB_SIZE = 50
EMBED_DIM = 32
NUM_CLASSES = 4
FILTER_SIZES = (3, 4, 5)
NUM_FILTERS = 16
BATCH = 2
SEQ_LEN = 16

MAX_FS = max(FILTER_SIZES)
NFEAT = len(FILTER_SIZES) * NUM_FILTERS          # 48
BL = BATCH * SEQ_LEN                             # 32 rows of the im2col slab
SUBLANE_PAD = 8                                  # 8-aligned zero time extension

# post-ReLU zero-masking needs >= 1 valid time step for every filter size
assert SEQ_LEN >= MAX_FS, "SEQ_LEN must be >= max(FILTER_SIZES)"
assert SUBLANE_PAD >= MAX_FS - 1


def _round_up(x, m):
    return (x + m - 1) // m * m


VP = _round_up(VOCAB_SIZE, 8)                    # 56: padded one-hot / table rows

# ---- packed-parameter row layout (single f32 buffer, width = NFEAT = 48) ----
ROW_TABLE = 0                                    # rows [0, 56)    cols [0, E)
ROW_WCAT = ROW_TABLE + VP                        # rows [56, 216)  cols [0, 48)
ROW_BCAT = ROW_WCAT + MAX_FS * EMBED_DIM         # row 216         cols [0, 48)
ROW_WFC = _round_up(ROW_BCAT + 1, 8)             # rows [224, 272) cols [0, C)
ROW_BFC = ROW_WFC + NFEAT                        # row 272         cols [0, C)
ROW_MASK = _round_up(ROW_BFC + 1, 8)             # rows [280, 312) cols [0, 48)
ROWS_TOTAL = ROW_MASK + BL                       # 312 (multiple of 8)
WIDTH = NFEAT                                    # 48


def _textcnn_kernel(tok_ref, w_ref, out_ref):
    """Embedding (one-hot MXU lookup) + fused im2col conv + ReLU + masked
    max-over-time + FC; all operands sliced from one packed VMEM buffer."""
    # ---- embedding lookup: 2-D one-hot compare + (BL, VP) @ (VP, E) matmul ----
    lane = jax.lax.broadcasted_iota(jnp.int32, (BL, VP), 1)
    onehot = (lane == tok_ref[...]).astype(jnp.float32)              # (32, 56)
    table = w_ref[ROW_TABLE:ROW_TABLE + VP, 0:EMBED_DIM]             # (56, 32)
    emb = jnp.dot(onehot, table, preferred_element_type=jnp.float32)  # (32, 32)

    # ---- im2col: 8-aligned zero time-extension + shifted slabs ----
    # (equivalent to the suggested pltpu.roll slabs: same sublane-shift work,
    #  no unaligned intermediate, no wrap-around; wcat's zero rows kill s>=fs_g)
    emb_ext = jnp.concatenate(
        [emb, jnp.zeros((SUBLANE_PAD, EMBED_DIM), jnp.float32)], axis=0)  # (40, 32)
    cols = jnp.concatenate(
        [emb_ext[s:s + BL, :] for s in range(MAX_FS)], axis=1)       # (32, 160)

    # ---- fused conv for all three filter sizes + bias + ReLU + time mask ----
    wcat = w_ref[ROW_WCAT:ROW_WCAT + MAX_FS * EMBED_DIM, :]          # (160, 48)
    bcat = w_ref[ROW_BCAT:ROW_BCAT + 1, :]                           # (1, 48)
    conv = jnp.dot(cols, wcat, preferred_element_type=jnp.float32)   # (32, 48)
    conv = jnp.maximum(conv + bcat, 0.0)
    conv = conv * w_ref[ROW_MASK:ROW_MASK + BL, :]   # zero invalid t (post-ReLU safe)

    # ---- max-over-time pool: (32, 48) -> (2, 16, 48) is sublane-aligned ----
    feat = jnp.max(conv.reshape(BATCH, SEQ_LEN, NFEAT), axis=1)      # (2, 48)

    # Dropout(p=0.5) in eval mode is identity.
    wfc = w_ref[ROW_WFC:ROW_WFC + NFEAT, 0:NUM_CLASSES]              # (48, 4)
    bfc = w_ref[ROW_BFC:ROW_BFC + 1, 0:NUM_CLASSES]                  # (1, 4)
    logits = jnp.dot(feat, wfc, preferred_element_type=jnp.float32) + bfc
    out_ref[...] = logits.astype(out_ref.dtype)


def init_params(key):
    """Raw per-filter parameters (PyTorch-module layout)."""
    keys = jax.random.split(key, 9)
    return {
        'embedding': jax.random.normal(keys[0], (VOCAB_SIZE, EMBED_DIM),
                                       jnp.float32) * 0.1,
        'w3': jax.random.normal(keys[1], (3, EMBED_DIM, NUM_FILTERS), jnp.float32) * 0.05,
        'b3': jax.random.normal(keys[2], (1, NUM_FILTERS), jnp.float32) * 0.01,
        'w4': jax.random.normal(keys[3], (4, EMBED_DIM, NUM_FILTERS), jnp.float32) * 0.05,
        'b4': jax.random.normal(keys[4], (1, NUM_FILTERS), jnp.float32) * 0.01,
        'w5': jax.random.normal(keys[5], (5, EMBED_DIM, NUM_FILTERS), jnp.float32) * 0.05,
        'b5': jax.random.normal(keys[6], (1, NUM_FILTERS), jnp.float32) * 0.01,
        'wfc': jax.random.normal(keys[7], (NFEAT, NUM_CLASSES), jnp.float32) * 0.05,
        'bfc': jax.random.normal(keys[8], (1, NUM_CLASSES), jnp.float32) * 0.01,
    }


def pack_params(raw):
    """One-time repack of all parameters + the constant valid-time mask into a
    single (ROWS_TOTAL, 48) f32 buffer with 8-aligned static row offsets."""
    buf = np.zeros((ROWS_TOTAL, WIDTH), np.float32)
    buf[0:VOCAB_SIZE, 0:EMBED_DIM] = np.asarray(raw['embedding'])
    for g, (fs, wk) in enumerate(zip(FILTER_SIZES, ('w3', 'w4', 'w5'))):
        w = np.asarray(raw[wk])                       # (fs, E, NF)
        buf[ROW_WCAT:ROW_WCAT + fs * EMBED_DIM,
            g * NUM_FILTERS:(g + 1) * NUM_FILTERS] = w.reshape(fs * EMBED_DIM,
                                                               NUM_FILTERS)
    buf[ROW_BCAT, 0:NFEAT] = np.concatenate(
        [np.asarray(raw['b3']).ravel(), np.asarray(raw['b4']).ravel(),
         np.asarray(raw['b5']).ravel()])
    buf[ROW_WFC:ROW_WFC + NFEAT, 0:NUM_CLASSES] = np.asarray(raw['wfc'])
    buf[ROW_BFC, 0:NUM_CLASSES] = np.asarray(raw['bfc']).ravel()
    # valid-time mask, tiled over batch: row b*L + t, group g is valid iff t <= L - fs_g
    for b in range(BATCH):
        for g, fs in enumerate(FILTER_SIZES):
            valid = SEQ_LEN - fs + 1
            buf[ROW_MASK + b * SEQ_LEN:ROW_MASK + b * SEQ_LEN + valid,
                g * NUM_FILTERS:(g + 1) * NUM_FILTERS] = 1.0
    return jnp.asarray(buf)


@jax.jit
def textcnn_forward(x_tokens, packed):
    """x_tokens: (B, L) int32 token ids.  Returns logits (B, NUM_CLASSES)."""
    B, L = x_tokens.shape
    assert (B, L) == (BATCH, SEQ_LEN)
    tok2d = x_tokens.reshape(B * L, 1).astype(jnp.int32)

    flops = 2 * (BL * VP * EMBED_DIM                      # one-hot embedding matmul
                 + BL * MAX_FS * EMBED_DIM * NFEAT        # fused conv matmul
                 + BATCH * NFEAT * NUM_CLASSES)           # fc
    bytes_accessed = (tok2d.size * 4 + ROWS_TOTAL * WIDTH * 4
                      + BATCH * NUM_CLASSES * 4)
    cost = pl.CostEstimate(flops=flops, transcendentals=0,
                           bytes_accessed=bytes_accessed)

    vmem = pl.BlockSpec(memory_space=pltpu.MemorySpace.VMEM)
    return pl.pallas_call(
        _textcnn_kernel,
        out_shape=jax.ShapeDtypeStruct((B, NUM_CLASSES), jnp.float32),
        in_specs=[vmem, vmem],
        out_specs=vmem,
        cost_estimate=cost,
    )(tok2d, packed)


def reference_forward(x_tokens, raw):
    """Pure-JAX reference mirroring the PyTorch forward (eval mode)."""
    emb = raw['embedding'][x_tokens]                      # (B, L, E)
    feats = []
    for fs, wk, bk in ((3, 'w3', 'b3'), (4, 'w4', 'b4'), (5, 'w5', 'b5')):
        T = emb.shape[1] - fs + 1
        acc = jnp.zeros((emb.shape[0], T, NUM_FILTERS), jnp.float32)
        for s in range(fs):
            acc = acc + jnp.einsum('bte,en->btn', emb[:, s:s + T, :], raw[wk][s])
        acc = jnp.maximum(acc + raw[bk][None, :, :], 0.0)
        feats.append(jnp.max(acc, axis=1))
    feat = jnp.concatenate(feats, axis=1)
    return feat @ raw['wfc'] + raw['bfc']


if __name__ == "__main__":
    key = jax.random.PRNGKey(0)
    pkey, xkey = jax.random.split(key)
    raw_params = init_params(pkey)
    packed_params = pack_params(raw_params)

    x = jax.random.randint(xkey, (BATCH, SEQ_LEN), 0, VOCAB_SIZE, dtype=jnp.int32)

    logits = jax.block_until_ready(textcnn_forward(x, packed_params))

    ref = reference_forward(x, raw_params)
    assert logits.shape == (BATCH, NUM_CLASSES)
    assert jnp.allclose(logits, ref, atol=1e-4, rtol=1e-4), (logits, ref)

    print("KERNEL_OK")
</pallas_src>

<mosaic_0001>
module attributes {stable_mosaic.version = 11 : i64} {
  func.func @_textcnn_kernel(%arg0: memref<32x1xi32, #tpu.memory_space<vmem>>, %arg1: memref<312x48xf32, #tpu.memory_space<vmem>>, %arg2: memref<2x4xf32, #tpu.memory_space<vmem>>) attributes {dimension_semantics = [], scalar_prefetch = 0 : i64, scratch_operands = 0 : i64, tpu.core_type = #tpu.core_type<tc>} {
    %0 = tpu.iota {dimensions = array<i32: 1>} : vector<32x56xi32>
    %c0 = arith.constant 0 : index
    %c0_0 = arith.constant 0 : index
    %1 = vector.load %arg0[%c0, %c0_0] : memref<32x1xi32, #tpu.memory_space<vmem>>, vector<32x1xi32>
    %2 = vector.broadcast %1 : vector<32x1xi32> to vector<32x56xi32>
    %3 = arith.cmpi eq, %0, %2 : vector<32x56xi32>
    %4 = arith.extui %3 : vector<32x56xi1> to vector<32x56xi32>
    %5 = arith.sitofp %4 : vector<32x56xi32> to vector<32x56xf32>
    %c0_1 = arith.constant 0 : index
    %c0_2 = arith.constant 0 : index
    %6 = vector.load %arg1[%c0_1, %c0_2] : memref<312x48xf32, #tpu.memory_space<vmem>>, vector<56x32xf32>
    %cst = arith.constant dense<0.000000e+00> : vector<32x32xf32>
    %7 = tpu.matmul %5, %6, %cst {dimension_numbers = #tpu.dot_dimension_numbers<[1], [0], [0], [1], [0, 0, 1, 1], [], []>} : vector<32x56xf32>, vector<56x32xf32>, vector<32x32xf32> -> vector<32x32xf32>
    %cst_3 = arith.constant 0.000000e+00 : f32
    %8 = vector.broadcast %cst_3 : f32 to vector<8x32xf32>
    %9 = tpu.concatenate %7, %8 in 0 : vector<32x32xf32>, vector<8x32xf32> -> vector<40x32xf32>
    %10 = vector.extract_strided_slice %9 {offsets = [0, 0], sizes = [32, 32], strides = [1, 1]} : vector<40x32xf32> to vector<32x32xf32>
    %11 = vector.extract_strided_slice %9 {offsets = [1, 0], sizes = [32, 32], strides = [1, 1]} : vector<40x32xf32> to vector<32x32xf32>
    %12 = vector.extract_strided_slice %9 {offsets = [2, 0], sizes = [32, 32], strides = [1, 1]} : vector<40x32xf32> to vector<32x32xf32>
    %13 = vector.extract_strided_slice %9 {offsets = [3, 0], sizes = [32, 32], strides = [1, 1]} : vector<40x32xf32> to vector<32x32xf32>
    %14 = vector.extract_strided_slice %9 {offsets = [4, 0], sizes = [32, 32], strides = [1, 1]} : vector<40x32xf32> to vector<32x32xf32>
    %15 = tpu.concatenate %10, %11, %12, %13, %14 in 1 : vector<32x32xf32>, vector<32x32xf32>, vector<32x32xf32>, vector<32x32xf32>, vector<32x32xf32> -> vector<32x160xf32>
    %c56 = arith.constant 56 : index
    %c0_4 = arith.constant 0 : index
    %16 = vector.load %arg1[%c56, %c0_4] : memref<312x48xf32, #tpu.memory_space<vmem>>, vector<160x48xf32>
    %c216 = arith.constant 216 : index
    %c0_5 = arith.constant 0 : index
    %17 = vector.load %arg1[%c216, %c0_5] : memref<312x48xf32, #tpu.memory_space<vmem>>, vector<1x48xf32>
    %cst_6 = arith.constant dense<0.000000e+00> : vector<32x48xf32>
    %18 = tpu.matmul %15, %16, %cst_6 {dimension_numbers = #tpu.dot_dimension_numbers<[1], [0], [0], [1], [0, 0, 1, 1], [], []>} : vector<32x160xf32>, vector<160x48xf32>, vector<32x48xf32> -> vector<32x48xf32>
    %19 = vector.broadcast %17 : vector<1x48xf32> to vector<32x48xf32>
    %20 = arith.addf %18, %19 : vector<32x48xf32>
    %cst_7 = arith.constant 0.000000e+00 : f32
    %21 = vector.broadcast %cst_7 : f32 to vector<32x48xf32>
    %22 = arith.maximumf %20, %21 : vector<32x48xf32>
    %c280 = arith.constant 280 : index
    %c0_8 = arith.constant 0 : index
    %23 = vector.load %arg1[%c280, %c0_8] : memref<312x48xf32, #tpu.memory_space<vmem>>, vector<32x48xf32>
    %24 = arith.mulf %22, %23 : vector<32x48xf32>
    %25 = vector.shape_cast %24 : vector<32x48xf32> to vector<2x16x48xf32>
    %cst_9 = arith.constant dense<0xFF800000> : vector<2x48xf32>
    %26 = vector.multi_reduction <maximumf>, %25, %cst_9 [1] : vector<2x16x48xf32> to vector<2x48xf32>
    %c224 = arith.constant 224 : index
    %c0_10 = arith.constant 0 : index
    %27 = vector.load %arg1[%c224, %c0_10] : memref<312x48xf32, #tpu.memory_space<vmem>>, vector<48x4xf32>
    %c272 = arith.constant 272 : index
    %c0_11 = arith.constant 0 : index
    %28 = vector.load %arg1[%c272, %c0_11] : memref<312x48xf32, #tpu.memory_space<vmem>>, vector<1x4xf32>
    %cst_12 = arith.constant dense<0.000000e+00> : vector<2x4xf32>
    %29 = tpu.matmul %26, %27, %cst_12 {dimension_numbers = #tpu.dot_dimension_numbers<[1], [0], [0], [1], [0, 0, 1, 1], [], []>} : vector<2x48xf32>, vector<48x4xf32>, vector<2x4xf32> -> vector<2x4xf32>
    %30 = vector.broadcast %28 : vector<1x4xf32> to vector<2x4xf32>
    %31 = arith.addf %29, %30 : vector<2x4xf32>
    %c0_13 = arith.constant 0 : index
    %c0_14 = arith.constant 0 : index
    %32 = vector.load %arg2[%c0_13, %c0_14] : memref<2x4xf32, #tpu.memory_space<vmem>>, vector<2x4xf32>
    tpu.vector_store %arg2[%c0_13, %c0_14], %31 {strides = array<i32>} : memref<2x4xf32, #tpu.memory_space<vmem>>, vector<2x4xf32>,
    return
  }
}

</mosaic_0001>

<llo_original>
// kernel: textcnn_forward.1
$region0: #{textcnn_forward.1}
  #allocation0 [shape = 'u32[]', space=smem, size = 0x4, offset = 0x4, fixed_abs, tag = 'smem constant byte address 0x4 - core index']
  #allocation1 [shape = 'u32[144,128]{1,0:T(1,128)}', space=vmem, size = 0x12000, scoped, tag = 'internal scratch']
  %s0 = inlined_call_operand.vmem [shape: s32[32,1], index: 0, kind: input, shape index: {}]
  %s1 = inlined_call_operand.vmem [shape: f32[312,48], index: 1, kind: input, shape index: {}]
  %s2 = inlined_call_operand.hbm [shape: f32[2,4], index: 2, kind: output, shape index: {}]
  %s3 = sld [smem:[#allocation0]]
  $region18: #{textcnn_forward.1} parent=0
    _
  %s5 = ssub.s32 1, %s3
  %s6 = scalar_select 0, %s5, %s3
  $region1: #{textcnn_forward.1} parent=0
    #allocation2 [shape = 'u8[1024]{0}', space=vmem, size = 0x400, scoped, tag = 'output window, operand 0, single buffered']
    #allocation3 [shape = 's32[1]{0}', space=sflag, size = 0x4, scoped, tag = 'scoped memory for textcnn_forward.1']
    %7 = vsyncpa [#allocation3], 0
    // Predicated region
    $region2: #{textcnn_forward.1} parent=1 // pred_check
      _
    $region3: #{textcnn_forward.1} parent=1 // pred_check_branch
      %9 = sbr.rel (0) target = $region5
    $region4: #{textcnn_forward.1} parent=1 // pred_region
      _
    $region5: #{textcnn_forward.1} parent=1 // pred_fallthru
      _
    // Predicated region
    $region6: #{textcnn_forward.1} parent=1 // pred_check
      _
    $region7: #{textcnn_forward.1} parent=1 // pred_check_branch
      %11 = sbr.rel (0) target = $region9
    $region8: #{textcnn_forward.1} parent=1 // pred_region
      _
    $region9: #{textcnn_forward.1} parent=1 // pred_fallthru
      _
    %v12 = vlaneseq
    %v13 = vand.u32 %v12, 127
    %v14 = vld [vmem:[%s0] sm:$0xff]
    %v15 = vld [vmem:[%s0 + $0x8] sm:$0xff]
    %v16 = vld [vmem:[%s0 + $0x10] sm:$0xff]
    %v17 = vld [vmem:[%s0 + $0x18] sm:$0xff]
    %18 = vset.pattern.permute.xlu0 0
    %19 = vperm.xlu0 %18, %v14
    %v20 = vpop.permute.xlu0 %19
    %21 = vset.pattern.permute.xlu0 0
    %22 = vperm.xlu0 %21, %v15
    %v23 = vpop.permute.xlu0 %22
    %24 = vset.pattern.permute.xlu0 0
    %25 = vperm.xlu0 %24, %v16
    %v26 = vpop.permute.xlu0 %25
    %27 = vset.pattern.permute.xlu0 0
    %28 = vperm.xlu0 %27, %v17
    %v29 = vpop.permute.xlu0 %28
    %vm30 = vcmp.eq.s32.totalorder %v13, %v20
    %vm31 = vcmp.eq.s32.totalorder %v13, %v23
    %vm32 = vcmp.eq.s32.totalorder %v13, %v26
    %vm33 = vcmp.eq.s32.totalorder %v13, %v29
    %v34 = vsel %vm30, 1, 0
    %v35 = vsel %vm31, 1, 0
    %v36 = vsel %vm32, 1, 0
    %v37 = vsel %vm33, 1, 0
    %v38 = vcvt.s32.f32 %v34
    %v39 = vcvt.s32.f32 %v35
    %v40 = vcvt.s32.f32 %v36
    %v41 = vcvt.s32.f32 %v37
    %v42 = vld [vmem:[%s1] sm:$0xff]
    %v43 = vld [vmem:[%s1 + $0x8] sm:$0xff]
    %v44 = vld [vmem:[%s1 + $0x10] sm:$0xff]
    %v45 = vld [vmem:[%s1 + $0x18] sm:$0xff]
    %v46 = vld [vmem:[%s1 + $0x20] sm:$0xff]
    %v47 = vld [vmem:[%s1 + $0x28] sm:$0xff]
    %v48 = vld [vmem:[%s1 + $0x30] sm:$0xff]
    %vm49 = vcmask 457728
    %v51 = vsel %vm49, %v38, 0
    %v54 = vsel %vm49, %v39, 0
    %v57 = vsel %vm49, %v40, 0
    %v60 = vsel %vm49, %v41, 0
    %62 = vmatprep.subr.mxu0 0.0
    %63 = vmatpush1.msra.mxu0 0.0
    %64 = vmatprep.subr.mxu0 0.0
    %65 = vmatpush1.msra.mxu0 0.0
    %66 = vmatprep.subr.mxu0 0.0
    %67 = vmatpush1.msra.mxu0 0.0
    %68 = vmatprep.subr.mxu0 0.0
    %69 = vmatpush1.msra.mxu0 0.0
    %70 = vmatprep.subr.mxu0 0.0
    %71 = vmatpush1.msra.mxu0 0.0
    %72 = vmatprep.subr.mxu0 0.0
    %73 = vmatpush1.msra.mxu0 0.0
    %74 = vmatprep.subr.mxu0 0.0
    %75 = vmatpush1.msra.mxu0 0.0
    %76 = vmatprep.subr.mxu0 0.0
    %77 = vmatpush1.msra.mxu0 0.0
    %78 = vmatprep.subr.mxu0 0.0
    %79 = vmatpush1.msra.mxu0 0.0
    %80 = vmatprep.subr.mxu0 0.0
    %81 = vmatpush1.msra.mxu0 %v48
    %82 = vmatprep.subr.mxu0 0.0
    %83 = vmatpush1.msra.mxu0 %v47
    %84 = vmatprep.subr.mxu0 0.0
    %85 = vmatpush1.msra.mxu0 %v46
    %86 = vmatprep.subr.mxu0 0.0
    %87 = vmatpush1.msra.mxu0 %v45
    %88 = vmatprep.subr.mxu0 0.0
    %89 = vmatpush1.msra.mxu0 %v44
    %90 = vmatprep.subr.mxu0 0.0
    %91 = vmatpush1.msra.mxu0 %v43
    %92 = vmatprep.subr.mxu0 0.0
    %93 = vmatpush1.msra.mxu0 %v42
    %94 = vmatprep.subr.mxu0 0.0
    %95 = vmatpush2.msra.mxu0 0.0
    %96 = vmatprep.subr.mxu0 0.0
    %97 = vmatpush2.msra.mxu0 0.0
    %98 = vmatprep.subr.mxu0 0.0
    %99 = vmatpush2.msra.mxu0 0.0
    %100 = vmatprep.subr.mxu0 0.0
    %101 = vmatpush2.msra.mxu0 0.0
    %102 = vmatprep.subr.mxu0 0.0
    %103 = vmatpush2.msra.mxu0 0.0
    %104 = vmatprep.subr.mxu0 0.0
    %105 = vmatpush2.msra.mxu0 0.0
    %106 = vmatprep.subr.mxu0 0.0
    %107 = vmatpush2.msra.mxu0 0.0
    %108 = vmatprep.subr.mxu0 0.0
    %109 = vmatpush2.msra.mxu0 0.0
    %110 = vmatprep.subr.mxu0 0.0
    %111 = vmatpush2.msra.mxu0 0.0
    %112 = vmatprep.subr.mxu0 0.0
    %113 = vmatpush2.msra.mxu0 0.0
    %114 = vmatprep.subr.mxu0 0.0
    %115 = vmatpush2.msra.mxu0 0.0
    %116 = vmatprep.subr.mxu0 0.0
    %117 = vmatpush2.msra.mxu0 0.0
    %118 = vmatprep.subr.mxu0 0.0
    %119 = vmatpush2.msra.mxu0 0.0
    %120 = vmatprep.subr.mxu0 0.0
    %121 = vmatpush2.msra.mxu0 0.0
    %122 = vmatprep.subr.mxu0 0.0
    %123 = vmatpush2.msra.mxu0 0.0
    %124 = vmatprep.subr.mxu0 0.0
    %125 = vmatpush2.msra.mxu0 0.0
    %126 = vmatprep.mubr.f32.mxu0 0.0
    %127 = vmatmul.mubr.f32.gmra.mxu0 %v51
    %v128 = vpop.f32.mrf.mxu0
    %v129 = vadd.f32 0.0, %v128
    %v130 = vpop.f32.mrf.mxu0
    %131 = vmatprep.mubr.f32.mxu0 0.0
    %132 = vmatmul.mubr.f32.gmra.mxu0 %v54
    %v133 = vpop.f32.mrf.mxu0
    %v134 = vadd.f32 0.0, %v133
    %v135 = vpop.f32.mrf.mxu0
    %136 = vmatprep.mubr.f32.mxu0 0.0
    %137 = vmatmul.mubr.f32.gmra.mxu0 %v57
    %v138 = vpop.f32.mrf.mxu0
    %v139 = vadd.f32 0.0, %v138
    %v140 = vpop.f32.mrf.mxu0
    %141 = vmatprep.mubr.f32.mxu0 0.0
    %142 = vmatmul.mubr.f32.gmra.mxu0 %v60
    %v143 = vpop.f32.mrf.mxu0
    %v144 = vadd.f32 0.0, %v143
    %v145 = vpop.f32.mrf.mxu0
    %146 = vdwg.mxu0
    %vm152 = vcmask 1046528
    %v153 = vrot.slane %v129, 1
    %v154 = vrot.slane %v134, 1
    %v155 = vsel %vm152, %v153, %v154
    %v156 = vrot.slane %v139, 1
    %v157 = vsel %vm152, %v154, %v156
    %v158 = vrot.slane %v144, 1
    %v159 = vsel %vm152, %v156, %v158
    %v160 = vrot.slane 0.0, 1
    %v161 = vsel %vm152, %v158, %v160
    %162 = vrot.lane.b32.xlu0 %v155, 32
    %v163 = vpop.permute.xlu0 %162
    %164 = vrot.lane.b32.xlu0 %v157, 32
    %v165 = vpop.permute.xlu0 %164
    %166 = vrot.lane.b32.xlu0 %v159, 32
    %v167 = vpop.permute.xlu0 %166
    %168 = vrot.lane.b32.xlu0 %v161, 32
    %v169 = vpop.permute.xlu0 %168
    %vm174 = vcmask 1045504
    %v175 = vrot.slane %v129, 2
    %v176 = vrot.slane %v134, 2
    %v177 = vsel %vm174, %v175, %v176
    %v178 = vrot.slane %v139, 2
    %v179 = vsel %vm174, %v176, %v178
    %v180 = vrot.slane %v144, 2
    %v181 = vsel %vm174, %v178, %v180
    %v182 = vrot.slane 0.0, 2
    %v183 = vsel %vm174, %v180, %v182
    %184 = vrot.lane.b32.xlu0 %v177, 64
    %v185 = vpop.permute.xlu0 %184
    %186 = vrot.lane.b32.xlu0 %v179, 64
    %v187 = vpop.permute.xlu0 %186
    %188 = vrot.lane.b32.xlu0 %v181, 64
    %v189 = vpop.permute.xlu0 %188
    %190 = vrot.lane.b32.xlu0 %v183, 64
    %v191 = vpop.permute.xlu0 %190
    %vm196 = vcmask 1044480
    %v197 = vrot.slane %v129, 3
    %v198 = vrot.slane %v134, 3
    %v199 = vsel %vm196, %v197, %v198
    %v200 = vrot.slane %v139, 3
    %v201 = vsel %vm196, %v198, %v200
    %v202 = vrot.slane %v144, 3
    %v203 = vsel %vm196, %v200, %v202
    %v204 = vrot.slane 0.0, 3
    %v205 = vsel %vm196, %v202, %v204
    %206 = vrot.lane.b32.xlu0 %v199, 96
    %v207 = vpop.permute.xlu0 %206
    %208 = vrot.lane.b32.xlu0 %v201, 96
    %v209 = vpop.permute.xlu0 %208
    %210 = vrot.lane.b32.xlu0 %v203, 96
    %v211 = vpop.permute.xlu0 %210
    %212 = vrot.lane.b32.xlu0 %v205, 96
    %v213 = vpop.permute.xlu0 %212
    %vm218 = vcmask 1043456
    %v219 = vrot.slane %v129, 4
    %v220 = vrot.slane %v134, 4
    %v221 = vsel %vm218, %v219, %v220
    %v222 = vrot.slane %v139, 4
    %v223 = vsel %vm218, %v220, %v222
    %v224 = vrot.slane %v144, 4
    %v225 = vsel %vm218, %v222, %v224
    %v226 = vrot.slane 0.0, 4
    %v227 = vsel %vm218, %v224, %v226
    %vm228 = vcmask 261120
    %v229 = vsel %vm228, %v129, %v163
    %v230 = vsel %vm228, %v134, %v165
    %v231 = vsel %vm228, %v139, %v167
    %v232 = vsel %vm228, %v144, %v169
    %vm233 = vcmask 523264
    %v234 = vsel %vm233, %v229, %v185
    %v235 = vsel %vm233, %v230, %v187
    %v236 = vsel %vm233, %v231, %v189
    %v237 = vsel %vm233, %v232, %v191
    %vm238 = vcmask 785408
    %v239 = vsel %vm238, %v234, %v207
    %v240 = vsel %vm238, %v235, %v209
    %v241 = vsel %vm238, %v236, %v211
    %v242 = vsel %vm238, %v237, %v213
    %v243 = vld [vmem:[%s1 + $0x38] sm:$0xff]
    %v244 = vld [vmem:[%s1 + $0x40] sm:$0xff]
    %v245 = vld [vmem:[%s1 + $0x48] sm:$0xff]
    %v246 = vld [vmem:[%s1 + $0x50] sm:$0xff]
    %v247 = vld [vmem:[%s1 + $0x58] sm:$0xff]
    %v248 = vld [vmem:[%s1 + $0x60] sm:$0xff]
    %v249 = vld [vmem:[%s1 + $0x68] sm:$0xff]
    %v250 = vld [vmem:[%s1 + $0x70] sm:$0xff]
    %v251 = vld [vmem:[%s1 + $0x78] sm:$0xff]
    %v252 = vld [vmem:[%s1 + $0x80] sm:$0xff]
    %v253 = vld [vmem:[%s1 + $0x88] sm:$0xff]
    %v254 = vld [vmem:[%s1 + $0x90] sm:$0xff]
    %v255 = vld [vmem:[%s1 + $0x98] sm:$0xff]
    %v256 = vld [vmem:[%s1 + $0xa0] sm:$0xff]
    %v257 = vld [vmem:[%s1 + $0xa8] sm:$0xff]
    %v258 = vld [vmem:[%s1 + $0xb0] sm:$0xff]
    %v259 = vld [vmem:[%s1 + $0xb8] sm:$0xff]
    %v260 = vld [vmem:[%s1 + $0xc0] sm:$0xff]
    %v261 = vld [vmem:[%s1 + $0xc8] sm:$0xff]
    %v262 = vld [vmem:[%s1 + $0xd0] sm:$0xff]
    %v263 = vld [vmem:[%s1 + $0xd8] sm:$0x1]
    %v264 = vlaneseq
    %v265 = vshrl.u32 %v264, 7
    %v266 = vsub.s32 0, %v265
    %v267 = vrot.slane %v263, %v266
    %v268 = vsel %vm228, %v221, 0
    %v270 = vsel %vm228, %v223, 0
    %v272 = vsel %vm228, %v225, 0
    %v274 = vsel %vm228, %v227, 0
    %276 = vmatprep.subr.mxu0 0.0
    %277 = vmatpush1.msra.mxu0 %v258
    %278 = vmatprep.subr.mxu0 0.0
    %279 = vmatpush1.msra.mxu0 %v257
    %280 = vmatprep.subr.mxu0 0.0
    %281 = vmatpush1.msra.mxu0 %v256
    %282 = vmatprep.subr.mxu0 0.0
    %283 = vmatpush1.msra.mxu0 %v255
    %284 = vmatprep.subr.mxu0 0.0
    %285 = vmatpush1.msra.mxu0 %v254
    %286 = vmatprep.subr.mxu0 0.0
    %287 = vmatpush1.msra.mxu0 %v253
    %288 = vmatprep.subr.mxu0 0.0
    %289 = vmatpush1.msra.mxu0 %v252
    %290 = vmatprep.subr.mxu0 0.0
    %291 = vmatpush1.msra.mxu0 %v251
    %292 = vmatprep.subr.mxu0 0.0
    %293 = vmatpush1.msra.mxu0 %v250
    %294 = vmatprep.subr.mxu0 0.0
    %295 = vmatpush1.msra.mxu0 %v249
    %296 = vmatprep.subr.mxu0 0.0
    %297 = vmatpush1.msra.mxu0 %v248
    %298 = vmatprep.subr.mxu0 0.0
    %299 = vmatpush1.msra.mxu0 %v247
    %300 = vmatprep.subr.mxu0 0.0
    %301 = vmatpush1.msra.mxu0 %v246
    %302 = vmatprep.subr.mxu0 0.0
    %303 = vmatpush1.msra.mxu0 %v245
    %304 = vmatprep.subr.mxu0 0.0
    %305 = vmatpush1.msra.mxu0 %v244
    %306 = vmatprep.subr.mxu0 0.0
    %307 = vmatpush1.msra.mxu0 %v243
    %308 = vmatprep.subr.mxu0 0.0
    %309 = vmatpush2.msra.mxu0 0.0
    %310 = vmatprep.subr.mxu0 0.0
    %311 = vmatpush2.msra.mxu0 0.0
    %312 = vmatprep.subr.mxu0 0.0
    %313 = vmatpush2.msra.mxu0 0.0
    %314 = vmatprep.subr.mxu0 0.0
    %315 = vmatpush2.msra.mxu0 0.0
    %316 = vmatprep.subr.mxu0 0.0
    %317 = vmatpush2.msra.mxu0 0.0
    %318 = vmatprep.subr.mxu0 0.0
    %319 = vmatpush2.msra.mxu0 0.0
    %320 = vmatprep.subr.mxu0 0.0
    %321 = vmatpush2.msra.mxu0 0.0
    %322 = vmatprep.subr.mxu0 0.0
    %323 = vmatpush2.msra.mxu0 0.0
    %324 = vmatprep.subr.mxu0 0.0
    %325 = vmatpush2.msra.mxu0 0.0
    %326 = vmatprep.subr.mxu0 0.0
    %327 = vmatpush2.msra.mxu0 0.0
    %328 = vmatprep.subr.mxu0 0.0
    %329 = vmatpush2.msra.mxu0 0.0
    %330 = vmatprep.subr.mxu0 0.0
    %331 = vmatpush2.msra.mxu0 0.0
    %332 = vmatprep.subr.mxu0 0.0
    %333 = vmatpush2.msra.mxu0 %v262
    %334 = vmatprep.subr.mxu0 0.0
    %335 = vmatpush2.msra.mxu0 %v261
    %336 = vmatprep.subr.mxu0 0.0
    %337 = vmatpush2.msra.mxu0 %v260
    %338 = vmatprep.subr.mxu0 0.0
    %339 = vmatpush2.msra.mxu0 %v259
    %340 = vmatprep.mubr.f32.mxu0 %v268
    %341 = vmatmul.mubr.f32.gmra.mxu0 %v239
    %v342 = vpop.f32.mrf.mxu0
    %v343 = vadd.f32 %v267, %v342
    %v344 = vpop.f32.mrf.mxu0
    %345 = vmatprep.mubr.f32.mxu0 %v270
    %346 = vmatmul.mubr.f32.gmra.mxu0 %v240
    %v347 = vpop.f32.mrf.mxu0
    %v348 = vadd.f32 %v267, %v347
    %v349 = vpop.f32.mrf.mxu0
    %350 = vmatprep.mubr.f32.mxu0 %v272
    %351 = vmatmul.mubr.f32.gmra.mxu0 %v241
    %v352 = vpop.f32.mrf.mxu0
    %v353 = vadd.f32 %v267, %v352
    %v354 = vpop.f32.mrf.mxu0
    %355 = vmatprep.mubr.f32.mxu0 %v274
    %356 = vmatmul.mubr.f32.gmra.mxu0 %v242
    %v357 = vpop.f32.mrf.mxu0
    %v358 = vadd.f32 %v267, %v357
    %v359 = vpop.f32.mrf.mxu0
    %360 = vdwg.mxu0
    %v361 = vmax.f32 %v343, 0.0
    %v362 = vmax.f32 %v348, 0.0
    %v363 = vmax.f32 %v353, 0.0
    %v364 = vmax.f32 %v358, 0.0
    %v365 = vld [vmem:[%s1 + $0x118] sm:$0xff]
    %v366 = vld [vmem:[%s1 + $0x120] sm:$0xff]
    %v367 = vld [vmem:[%s1 + $0x128] sm:$0xff]
    %v368 = vld [vmem:[%s1 + $0x130] sm:$0xff]
    %v369 = vmul.f32 %v361, %v365
    %v370 = vmul.f32 %v362, %v366
    %v371 = vmul.f32 %v363, %v367
    %v372 = vmul.f32 %v364, %v368
    %vm373 = vcmask 392192
    %v374 = vsel %vm373, %v369, -inf
    %v375 = vsel %vm373, %v370, -inf
    %v376 = vmax.f32 %v374, %v375
    %v377 = vrot.slane %v376, 4
    %v378 = vmax.f32 %v376, %v377
    %v379 = vrot.slane %v378, 2
    %v380 = vmax.f32 %v378, %v379
    %v381 = vrot.slane %v380, 1
    %v382 = vmax.f32 %v380, %v381
    %v383 = vsel %vm373, %v371, -inf
    %v384 = vsel %vm373, %v372, -inf
    %v385 = vmax.f32 %v383, %v384
    %v386 = vrot.slane %v385, 4
    %v387 = vmax.f32 %v385, %v386
    %v388 = vrot.slane %v387, 2
    %v389 = vmax.f32 %v387, %v388
    %v390 = vrot.slane %v389, 1
    %v391 = vmax.f32 %v389, %v390
    %v392 = vld [vmem:[%s1 + $0xe0] sm:$0xff]
    %v393 = vld [vmem:[%s1 + $0xe8] sm:$0xff]
    %v394 = vld [vmem:[%s1 + $0xf0] sm:$0xff]
    %v395 = vld [vmem:[%s1 + $0xf8] sm:$0xff]
    %v396 = vld [vmem:[%s1 + $0x100] sm:$0xff]
    %v397 = vld [vmem:[%s1 + $0x108] sm:$0xff]
    %v398 = vld [vmem:[%s1 + $0x110] sm:$0x1]
    %v399 = vlaneseq
    %v400 = vshrl.u32 %v399, 7
    %v401 = vsub.s32 0, %v400
    %v402 = vrot.slane %v398, %v401
    %vm405 = vcmask 1041409
    %v406 = vsel %vm405, %v391, %v382
    %v407 = vsel %vm373, %v406, 0
    %409 = vmatprep.subr.mxu0 0.0
    %410 = vmatpush1.msra.mxu0 0.0
    %411 = vmatprep.subr.mxu0 0.0
    %412 = vmatpush1.msra.mxu0 0.0
    %413 = vmatprep.subr.mxu0 0.0
    %414 = vmatpush1.msra.mxu0 0.0
    %415 = vmatprep.subr.mxu0 0.0
    %416 = vmatpush1.msra.mxu0 0.0
    %417 = vmatprep.subr.mxu0 0.0
    %418 = vmatpush1.msra.mxu0 0.0
    %419 = vmatprep.subr.mxu0 0.0
    %420 = vmatpush1.msra.mxu0 0.0
    %421 = vmatprep.subr.mxu0 0.0
    %422 = vmatpush1.msra.mxu0 0.0
    %423 = vmatprep.subr.mxu0 0.0
    %424 = vmatpush1.msra.mxu0 0.0
    %425 = vmatprep.subr.mxu0 0.0
    %426 = vmatpush1.msra.mxu0 0.0
    %427 = vmatprep.subr.mxu0 0.0
    %428 = vmatpush1.msra.mxu0 0.0
    %429 = vmatprep.subr.mxu0 0.0
    %430 = vmatpush1.msra.mxu0 %v397
    %431 = vmatprep.subr.mxu0 0.0
    %432 = vmatpush1.msra.mxu0 %v396
    %433 = vmatprep.subr.mxu0 0.0
    %434 = vmatpush1.msra.mxu0 %v395
    %435 = vmatprep.subr.mxu0 0.0
    %436 = vmatpush1.msra.mxu0 %v394
    %437 = vmatprep.subr.mxu0 0.0
    %438 = vmatpush1.msra.mxu0 %v393
    %439 = vmatprep.subr.mxu0 0.0
    %440 = vmatpush1.msra.mxu0 %v392
    %441 = vmatprep.subr.mxu0 0.0
    %442 = vmatpush2.msra.mxu0 0.0
    %443 = vmatprep.subr.mxu0 0.0
    %444 = vmatpush2.msra.mxu0 0.0
    %445 = vmatprep.subr.mxu0 0.0
    %446 = vmatpush2.msra.mxu0 0.0
    %447 = vmatprep.subr.mxu0 0.0
    %448 = vmatpush2.msra.mxu0 0.0
    %449 = vmatprep.subr.mxu0 0.0
    %450 = vmatpush2.msra.mxu0 0.0
    %451 = vmatprep.subr.mxu0 0.0
    %452 = vmatpush2.msra.mxu0 0.0
    %453 = vmatprep.subr.mxu0 0.0
    %454 = vmatpush2.msra.mxu0 0.0
    %455 = vmatprep.subr.mxu0 0.0
    %456 = vmatpush2.msra.mxu0 0.0
    %457 = vmatprep.subr.mxu0 0.0
    %458 = vmatpush2.msra.mxu0 0.0
    %459 = vmatprep.subr.mxu0 0.0
    %460 = vmatpush2.msra.mxu0 0.0
    %461 = vmatprep.subr.mxu0 0.0
    %462 = vmatpush2.msra.mxu0 0.0
    %463 = vmatprep.subr.mxu0 0.0
    %464 = vmatpush2.msra.mxu0 0.0
    %465 = vmatprep.subr.mxu0 0.0
    %466 = vmatpush2.msra.mxu0 0.0
    %467 = vmatprep.subr.mxu0 0.0
    %468 = vmatpush2.msra.mxu0 0.0
    %469 = vmatprep.subr.mxu0 0.0
    %470 = vmatpush2.msra.mxu0 0.0
    %471 = vmatprep.subr.mxu0 0.0
    %472 = vmatpush2.msra.mxu0 0.0
    %473 = vmatprep.mubr.f32.mxu0 0.0
    %474 = vmatmul.mubr.f32.gmra.mxu0 %v407
    %v475 = vpop.f32.mrf.mxu0
    %v476 = vadd.f32 %v402, %v475
    %v477 = vpop.f32.mrf.mxu0
    %478 = vdwg.mxu0
    %vm479 = vcmask 25600
    %480 = vst.msk [vmem:[#allocation2] sm:$0x3] %vm479, %v476
    // Predicated region
    $region10: #{textcnn_forward.1} parent=1 // pred_check
      _
    $region11: #{textcnn_forward.1} parent=1 // pred_check_branch
      %482 = sbr.rel (0) target = $region13
    $region12: #{textcnn_forward.1} parent=1 // pred_region
      %s484 = ssub.s32 32, 32
      %485 = vsyncadd [#allocation3], %s484
      %s487 = sshll.u32 [#allocation2], 4
      %s488 = int_to_ptr.vmem [resolvable:$true] %s487
      %490 = dma.vmem_to_hbm [thread:$0]  %s488, 32, %s2, [#allocation3]
    $region13: #{textcnn_forward.1} parent=1 // pred_fallthru
      _
    // Predicated region
    $region14: #{textcnn_forward.1} parent=1 // pred_check
      _
    $region15: #{textcnn_forward.1} parent=1 // pred_check_branch
      %492 = sbr.rel (0) target = $region17
    $region16: #{textcnn_forward.1} parent=1 // pred_region
      %493 = dma.done [#allocation3], 32
    $region17: #{textcnn_forward.1} parent=1 // pred_fallthru
      _
    %494 = vsyncpa [#allocation3], 1

</llo_original>
